<compile_context>
chip_gen: v6e
topology: v6e:2x2x1
jax: 0.10.0
libtpu: 0.0.40
codegen_flags: <defaults>
</compile_context>

<pallas_src>
import jax
import jax.numpy as jnp
from jax.experimental import pallas as pl
from jax.experimental.pallas import tpu as pltpu

BN_EPS = 1e-5
OUT_PAD = 128  # lane-dense padded width for the final layer / output store


def estimator_kernel(x_ref, w1_ref, w2_ref, w3_ref, bias_ref, out_ref):
    """Whole forward pass on one VMEM-resident tile.

    x_ref:    (B, D)        f32 flattened states
    w1_ref:   (D, H1)       f32, BN affine already folded in
    w2_ref:   (H1, H2)      f32
    w3_ref:   (H2, OUT_PAD) f32, zero-padded beyond num_actions
    bias_ref: (3, OUT_PAD)  f32, rows = [b1 | b2 | b3], each zero-padded
    out_ref:  (B, OUT_PAD)  f32, lane-dense padded output
    """
    H1 = w1_ref.shape[1]
    H2 = w2_ref.shape[1]

    x = x_ref[...]                                            # (B, D) f32

    # ---- BatchNorm1d statistics (training mode: biased batch variance) ----
    mean = jnp.mean(x, axis=0, keepdims=True)                 # (1, D)
    diff = x - mean
    var = jnp.mean(diff * diff, axis=0, keepdims=True)        # (1, D)
    xn = diff * jax.lax.rsqrt(var + BN_EPS)                   # (B, D)
    # (gamma scale + beta shift are folded into w1/b1 in the wrapper)

    # ---- Linear + Tanh (hidden layer 1) ----
    h = jnp.tanh(
        jnp.dot(xn, w1_ref[...], preferred_element_type=jnp.float32)
        + bias_ref[0:1, :H1])                                 # (B, H1)

    # ---- Linear + Tanh (hidden layer 2) ----
    h = jnp.tanh(
        jnp.dot(h, w2_ref[...], preferred_element_type=jnp.float32)
        + bias_ref[1:2, :H2])                                 # (B, H2)

    # ---- Final Linear (no activation), lane-dense padded output ----
    out_ref[...] = (
        jnp.dot(h, w3_ref[...], preferred_element_type=jnp.float32)
        + bias_ref[2:3, :])                                   # (B, OUT_PAD)


def _full_spec(shape):
    # Every array is a single full block resident in VMEM (no grid).
    return pl.BlockSpec(shape, lambda: tuple(0 for _ in shape))


def estimator_forward(s, params):
    """s: (B, *state_shape) float32.  Returns (B, num_actions) float32."""
    B = s.shape[0]
    x = s.reshape(B, -1)                                      # Flatten
    gamma, beta, w1, b1, w2, b2, w3, b3 = params
    D = x.shape[1]
    H1 = w1.shape[1]
    H2 = w2.shape[1]
    A = w3.shape[1]
    assert H1 <= OUT_PAD and H2 <= OUT_PAD and A <= OUT_PAD

    # ---- Fold BN affine into the first Linear (exact, linear fold) ----
    w1_f = gamma[:, None] * w1                                # (D, H1)
    b1_f = beta @ w1 + b1                                     # (H1,)

    # ---- Zero-pad the final layer to a lane-dense width ----
    w3_p = jnp.zeros((H2, OUT_PAD), jnp.float32).at[:, :A].set(w3)
    b3_p = jnp.zeros((OUT_PAD,), jnp.float32).at[:A].set(b3)

    # ---- Pack all biases into one (3, OUT_PAD) array (one DMA, not three) ----
    bias_pack = jnp.zeros((3, OUT_PAD), jnp.float32)
    bias_pack = bias_pack.at[0, :H1].set(b1_f)
    bias_pack = bias_pack.at[1, :H2].set(b2)
    bias_pack = bias_pack.at[2, :].set(b3_p)

    args = (x, w1_f, w2, w3_p, bias_pack)

    out_padded = pl.pallas_call(
        estimator_kernel,
        out_shape=jax.ShapeDtypeStruct((B, OUT_PAD), jnp.float32),
        in_specs=[_full_spec(a.shape) for a in args],
        out_specs=_full_spec((B, OUT_PAD)),
        compiler_params=pltpu.CompilerParams(),
    )(*args)

    # Padded columns of w3/b3 are zero; slice back to the real action dim.
    return out_padded[:, :A]


def init_params(key, state_dim, mlp_layers, num_actions):
    """Deterministic PyTorch-style init: Linear ~ U(-1/sqrt(fan_in), +),
    BatchNorm gamma=1, beta=0."""
    layer_dims = [state_dim] + list(mlp_layers) + [num_actions]
    gamma = jnp.ones((state_dim,), jnp.float32)
    beta = jnp.zeros((state_dim,), jnp.float32)
    ws, bs = [], []
    for i in range(len(layer_dims) - 1):
        fan_in, fan_out = layer_dims[i], layer_dims[i + 1]
        key, kw, kb = jax.random.split(key, 3)
        bound = 1.0 / jnp.sqrt(jnp.float32(fan_in))
        # stored as (in, out) for x @ W
        w = jax.random.uniform(kw, (fan_in, fan_out), jnp.float32,
                               minval=-bound, maxval=bound)
        b = jax.random.uniform(kb, (fan_out,), jnp.float32,
                               minval=-bound, maxval=bound)
        ws.append(w)
        bs.append(b)
    return (gamma, beta, ws[0], bs[0], ws[1], bs[1], ws[2], bs[2])


def reference_forward(s, params):
    """Pure-JAX reference mirroring the PyTorch module (train-mode BN)."""
    B = s.shape[0]
    x = s.reshape(B, -1)
    gamma, beta, w1, b1, w2, b2, w3, b3 = params
    mean = jnp.mean(x, axis=0, keepdims=True)
    var = jnp.mean((x - mean) ** 2, axis=0, keepdims=True)
    h = (x - mean) / jnp.sqrt(var + BN_EPS) * gamma + beta
    h = jnp.tanh(h @ w1 + b1)
    h = jnp.tanh(h @ w2 + b2)
    return h @ w3 + b3


if __name__ == "__main__":
    # Small shapes consistent with the module:
    #   state_shape = [4, 16]  -> flattened dim 64
    #   mlp_layers  = [32, 32]
    #   num_actions = 2
    #   batch       = 8
    B = 8
    state_shape = (4, 16)
    state_dim = 4 * 16
    mlp_layers = [32, 32]
    num_actions = 2

    key = jax.random.PRNGKey(0)
    key, ks = jax.random.split(key)
    s = jax.random.normal(ks, (B,) + state_shape, jnp.float32)
    params = init_params(key, state_dim, mlp_layers, num_actions)

    out = estimator_forward(s, params)
    out = jax.block_until_ready(out)

    ref = reference_forward(s, params)
    assert out.shape == (B, num_actions), out.shape
    assert jnp.allclose(out, ref, atol=2e-5, rtol=1e-5), (
        float(jnp.max(jnp.abs(out - ref))))

    # TODO(synk): running_mean/running_var are not tracked (train-mode BN only),
    # matching a freshly-constructed module that is never switched to eval().

    print("KERNEL_OK")
</pallas_src>

<mosaic_0001>
module attributes {stable_mosaic.version = 11 : i64} {
  func.func @estimator_kernel(%arg0: memref<8x64xf32, #tpu.memory_space<vmem>>, %arg1: memref<64x32xf32, #tpu.memory_space<vmem>>, %arg2: memref<32x32xf32, #tpu.memory_space<vmem>>, %arg3: memref<32x128xf32, #tpu.memory_space<vmem>>, %arg4: memref<3x128xf32, #tpu.memory_space<vmem>>, %arg5: memref<8x128xf32, #tpu.memory_space<vmem>>) attributes {dimension_semantics = [], scalar_prefetch = 0 : i64, scratch_operands = 0 : i64, tpu.core_type = #tpu.core_type<tc>} {
    %c0 = arith.constant 0 : index
    %c0_0 = arith.constant 0 : index
    %0 = vector.load %arg0[%c0, %c0_0] : memref<8x64xf32, #tpu.memory_space<vmem>>, vector<8x64xf32>
    %cst = arith.constant dense<0.000000e+00> : vector<64xf32>
    %1 = vector.multi_reduction <add>, %0, %cst [0] : vector<8x64xf32> to vector<64xf32>
    %2 = vector.shape_cast %1 : vector<64xf32> to vector<1x64xf32>
    %cst_1 = arith.constant 8.000000e+00 : f32
    %3 = vector.broadcast %cst_1 : f32 to vector<1x64xf32>
    %4 = arith.divf %2, %3 : vector<1x64xf32>
    %5 = vector.broadcast %4 : vector<1x64xf32> to vector<8x64xf32>
    %6 = arith.subf %0, %5 : vector<8x64xf32>
    %7 = arith.mulf %6, %6 : vector<8x64xf32>
    %cst_2 = arith.constant dense<0.000000e+00> : vector<64xf32>
    %8 = vector.multi_reduction <add>, %7, %cst_2 [0] : vector<8x64xf32> to vector<64xf32>
    %9 = vector.shape_cast %8 : vector<64xf32> to vector<1x64xf32>
    %cst_3 = arith.constant 8.000000e+00 : f32
    %10 = vector.broadcast %cst_3 : f32 to vector<1x64xf32>
    %11 = arith.divf %9, %10 : vector<1x64xf32>
    %cst_4 = arith.constant 9.99999974E-6 : f32
    %12 = vector.broadcast %cst_4 : f32 to vector<1x64xf32>
    %13 = arith.addf %11, %12 : vector<1x64xf32>
    %14 = math.rsqrt %13 : vector<1x64xf32>
    %15 = vector.broadcast %14 : vector<1x64xf32> to vector<8x64xf32>
    %16 = arith.mulf %6, %15 : vector<8x64xf32>
    %c0_5 = arith.constant 0 : index
    %c0_6 = arith.constant 0 : index
    %17 = vector.load %arg1[%c0_5, %c0_6] : memref<64x32xf32, #tpu.memory_space<vmem>>, vector<64x32xf32>
    %cst_7 = arith.constant dense<0.000000e+00> : vector<8x32xf32>
    %18 = tpu.matmul %16, %17, %cst_7 {dimension_numbers = #tpu.dot_dimension_numbers<[1], [0], [0], [1], [0, 0, 1, 1], [], []>} : vector<8x64xf32>, vector<64x32xf32>, vector<8x32xf32> -> vector<8x32xf32>
    %c0_8 = arith.constant 0 : index
    %c0_9 = arith.constant 0 : index
    %19 = vector.load %arg4[%c0_8, %c0_9] : memref<3x128xf32, #tpu.memory_space<vmem>>, vector<1x32xf32>
    %20 = vector.broadcast %19 : vector<1x32xf32> to vector<8x32xf32>
    %21 = arith.addf %18, %20 : vector<8x32xf32>
    %22 = math.tanh %21 : vector<8x32xf32>
    %c0_10 = arith.constant 0 : index
    %c0_11 = arith.constant 0 : index
    %23 = vector.load %arg2[%c0_10, %c0_11] : memref<32x32xf32, #tpu.memory_space<vmem>>, vector<32x32xf32>
    %cst_12 = arith.constant dense<0.000000e+00> : vector<8x32xf32>
    %24 = tpu.matmul %22, %23, %cst_12 {dimension_numbers = #tpu.dot_dimension_numbers<[1], [0], [0], [1], [0, 0, 1, 1], [], []>} : vector<8x32xf32>, vector<32x32xf32>, vector<8x32xf32> -> vector<8x32xf32>
    %c1 = arith.constant 1 : index
    %c0_13 = arith.constant 0 : index
    %25 = vector.load %arg4[%c1, %c0_13] : memref<3x128xf32, #tpu.memory_space<vmem>>, vector<1x32xf32>
    %26 = vector.broadcast %25 : vector<1x32xf32> to vector<8x32xf32>
    %27 = arith.addf %24, %26 : vector<8x32xf32>
    %28 = math.tanh %27 : vector<8x32xf32>
    %c0_14 = arith.constant 0 : index
    %c0_15 = arith.constant 0 : index
    %29 = vector.load %arg3[%c0_14, %c0_15] : memref<32x128xf32, #tpu.memory_space<vmem>>, vector<32x128xf32>
    %cst_16 = arith.constant dense<0.000000e+00> : vector<8x128xf32>
    %30 = tpu.matmul %28, %29, %cst_16 {dimension_numbers = #tpu.dot_dimension_numbers<[1], [0], [0], [1], [0, 0, 1, 1], [], []>} : vector<8x32xf32>, vector<32x128xf32>, vector<8x128xf32> -> vector<8x128xf32>
    %c2 = arith.constant 2 : index
    %c0_17 = arith.constant 0 : index
    %31 = vector.load %arg4[%c2, %c0_17] : memref<3x128xf32, #tpu.memory_space<vmem>>, vector<1x128xf32>
    %32 = vector.broadcast %31 : vector<1x128xf32> to vector<8x128xf32>
    %33 = arith.addf %30, %32 : vector<8x128xf32>
    %c0_18 = arith.constant 0 : index
    %c0_19 = arith.constant 0 : index
    %34 = vector.load %arg5[%c0_18, %c0_19] : memref<8x128xf32, #tpu.memory_space<vmem>>, vector<8x128xf32>
    tpu.vector_store %arg5[%c0_18, %c0_19], %33 {strides = array<i32>} : memref<8x128xf32, #tpu.memory_space<vmem>>, vector<8x128xf32>,
    return
  }
}

</mosaic_0001>

<llo_original>
// kernel: tpu_custom_call.1
$region0: #{tpu_custom_call.1}
  #allocation0 [shape = 'u32[]', space=smem, size = 0x4, offset = 0x4, fixed_abs, tag = 'smem constant byte address 0x4 - core index']
  #allocation1 [shape = 'u32[144,128]{1,0:T(1,128)}', space=vmem, size = 0x12000, scoped, tag = 'internal scratch']
  %s0 = inlined_call_operand.vmem [shape: f32[8,64], index: 0, kind: input, shape index: {}]
  %s1 = inlined_call_operand.vmem [shape: f32[64,32], index: 1, kind: input, shape index: {}]
  %s2 = inlined_call_operand.vmem [shape: f32[32,32], index: 2, kind: input, shape index: {}]
  %s3 = inlined_call_operand.vmem [shape: f32[32,128], index: 3, kind: input, shape index: {}]
  %s4 = inlined_call_operand.vmem [shape: f32[3,128], index: 4, kind: input, shape index: {}]
  %s5 = inlined_call_operand.hbm [shape: f32[8,128], index: 5, kind: output, shape index: {}]
  %s6 = sld [smem:[#allocation0]]
  $region30: #{tpu_custom_call.1} parent=0
    _
  %s8 = ssub.s32 1, %s6
  %s9 = scalar_select 0, %s8, %s6
  $region1: #{tpu_custom_call.1} parent=0
    #allocation2 [shape = 'u8[4096]{0}', space=vmem, size = 0x1000, scoped, tag = 'output window, operand 0, single buffered']
    #allocation3 [shape = 's32[1]{0}', space=sflag, size = 0x4, scoped, tag = 'scoped memory for tpu_custom_call.1']
    %10 = vsyncpa [#allocation3], 0
    // Predicated region
    $region2: #{tpu_custom_call.1} parent=1 // pred_check
      _
    $region3: #{tpu_custom_call.1} parent=1 // pred_check_branch
      %12 = sbr.rel (0) target = $region5
    $region4: #{tpu_custom_call.1} parent=1 // pred_region
      _
    $region5: #{tpu_custom_call.1} parent=1 // pred_fallthru
      _
    // Predicated region
    $region6: #{tpu_custom_call.1} parent=1 // pred_check
      _
    $region7: #{tpu_custom_call.1} parent=1 // pred_check_branch
      %14 = sbr.rel (0) target = $region9
    $region8: #{tpu_custom_call.1} parent=1 // pred_region
      _
    $region9: #{tpu_custom_call.1} parent=1 // pred_fallthru
      _
    // Predicated region
    $region10: #{tpu_custom_call.1} parent=1 // pred_check
      _
    $region11: #{tpu_custom_call.1} parent=1 // pred_check_branch
      %16 = sbr.rel (0) target = $region13
    $region12: #{tpu_custom_call.1} parent=1 // pred_region
      _
    $region13: #{tpu_custom_call.1} parent=1 // pred_fallthru
      _
    // Predicated region
    $region14: #{tpu_custom_call.1} parent=1 // pred_check
      _
    $region15: #{tpu_custom_call.1} parent=1 // pred_check_branch
      %18 = sbr.rel (0) target = $region17
    $region16: #{tpu_custom_call.1} parent=1 // pred_region
      _
    $region17: #{tpu_custom_call.1} parent=1 // pred_fallthru
      _
    // Predicated region
    $region18: #{tpu_custom_call.1} parent=1 // pred_check
      _
    $region19: #{tpu_custom_call.1} parent=1 // pred_check_branch
      %20 = sbr.rel (0) target = $region21
    $region20: #{tpu_custom_call.1} parent=1 // pred_region
      _
    $region21: #{tpu_custom_call.1} parent=1 // pred_fallthru
      _
    %v21 = vld [vmem:[%s0] sm:$0xff]
    %vm22 = vcmask 523264
    %v23 = vsel %vm22, %v21, 0.0
    %v24 = vrot.slane %v23, 4
    %v25 = vadd.f32 %v23, %v24
    %v26 = vrot.slane %v25, 2
    %v27 = vadd.f32 %v25, %v26
    %v28 = vrot.slane %v27, 1
    %v29 = vadd.f32 %v27, %v28
    %v30 = vrcp.pop 8.0
    %v31 = vmul.f32 %v29, %v30
    %v32 = vsub.f32 %v21, %v31
    %v33 = vmul.f32 %v32, %v32
    %v34 = vsel %vm22, %v33, 0.0
    %v35 = vrot.slane %v34, 4
    %v36 = vadd.f32 %v34, %v35
    %v37 = vrot.slane %v36, 2
    %v38 = vadd.f32 %v36, %v37
    %v39 = vrot.slane %v38, 1
    %v40 = vadd.f32 %v38, %v39
    %v41 = vmul.f32 %v40, %v30
    %v42 = vadd.f32 %v41, 1e-05
    %v43 = vrsqrt.pop %v42
    %v44 = vmul.f32 %v32, %v43
    %v45 = vld [vmem:[%s1] sm:$0xff]
    %v46 = vld [vmem:[%s1 + $0x8] sm:$0xff]
    %v47 = vld [vmem:[%s1 + $0x10] sm:$0xff]
    %v48 = vld [vmem:[%s1 + $0x18] sm:$0xff]
    %v49 = vld [vmem:[%s1 + $0x20] sm:$0xff]
    %v50 = vld [vmem:[%s1 + $0x28] sm:$0xff]
    %v51 = vld [vmem:[%s1 + $0x30] sm:$0xff]
    %v52 = vld [vmem:[%s1 + $0x38] sm:$0xff]
    %v53 = vld [vmem:[%s4] sm:$0x1]
    %v54 = vlaneseq
    %v55 = vshrl.u32 %v54, 7
    %v56 = vsub.s32 0, %v55
    %v57 = vrot.slane %v53, %v56
    %v59 = vsel %vm22, %v44, 0
    %61 = vmatprep.subr.mxu0 0.0
    %62 = vmatpush1.msra.mxu0 0.0
    %63 = vmatprep.subr.mxu0 0.0
    %64 = vmatpush1.msra.mxu0 0.0
    %65 = vmatprep.subr.mxu0 0.0
    %66 = vmatpush1.msra.mxu0 0.0
    %67 = vmatprep.subr.mxu0 0.0
    %68 = vmatpush1.msra.mxu0 0.0
    %69 = vmatprep.subr.mxu0 0.0
    %70 = vmatpush1.msra.mxu0 0.0
    %71 = vmatprep.subr.mxu0 0.0
    %72 = vmatpush1.msra.mxu0 0.0
    %73 = vmatprep.subr.mxu0 0.0
    %74 = vmatpush1.msra.mxu0 0.0
    %75 = vmatprep.subr.mxu0 0.0
    %76 = vmatpush1.msra.mxu0 0.0
    %77 = vmatprep.subr.mxu0 0.0
    %78 = vmatpush1.msra.mxu0 %v52
    %79 = vmatprep.subr.mxu0 0.0
    %80 = vmatpush1.msra.mxu0 %v51
    %81 = vmatprep.subr.mxu0 0.0
    %82 = vmatpush1.msra.mxu0 %v50
    %83 = vmatprep.subr.mxu0 0.0
    %84 = vmatpush1.msra.mxu0 %v49
    %85 = vmatprep.subr.mxu0 0.0
    %86 = vmatpush1.msra.mxu0 %v48
    %87 = vmatprep.subr.mxu0 0.0
    %88 = vmatpush1.msra.mxu0 %v47
    %89 = vmatprep.subr.mxu0 0.0
    %90 = vmatpush1.msra.mxu0 %v46
    %91 = vmatprep.subr.mxu0 0.0
    %92 = vmatpush1.msra.mxu0 %v45
    %93 = vmatprep.subr.mxu0 0.0
    %94 = vmatpush2.msra.mxu0 0.0
    %95 = vmatprep.subr.mxu0 0.0
    %96 = vmatpush2.msra.mxu0 0.0
    %97 = vmatprep.subr.mxu0 0.0
    %98 = vmatpush2.msra.mxu0 0.0
    %99 = vmatprep.subr.mxu0 0.0
    %100 = vmatpush2.msra.mxu0 0.0
    %101 = vmatprep.subr.mxu0 0.0
    %102 = vmatpush2.msra.mxu0 0.0
    %103 = vmatprep.subr.mxu0 0.0
    %104 = vmatpush2.msra.mxu0 0.0
    %105 = vmatprep.subr.mxu0 0.0
    %106 = vmatpush2.msra.mxu0 0.0
    %107 = vmatprep.subr.mxu0 0.0
    %108 = vmatpush2.msra.mxu0 0.0
    %109 = vmatprep.subr.mxu0 0.0
    %110 = vmatpush2.msra.mxu0 0.0
    %111 = vmatprep.subr.mxu0 0.0
    %112 = vmatpush2.msra.mxu0 0.0
    %113 = vmatprep.subr.mxu0 0.0
    %114 = vmatpush2.msra.mxu0 0.0
    %115 = vmatprep.subr.mxu0 0.0
    %116 = vmatpush2.msra.mxu0 0.0
    %117 = vmatprep.subr.mxu0 0.0
    %118 = vmatpush2.msra.mxu0 0.0
    %119 = vmatprep.subr.mxu0 0.0
    %120 = vmatpush2.msra.mxu0 0.0
    %121 = vmatprep.subr.mxu0 0.0
    %122 = vmatpush2.msra.mxu0 0.0
    %123 = vmatprep.subr.mxu0 0.0
    %124 = vmatpush2.msra.mxu0 0.0
    %125 = vmatprep.mubr.f32.mxu0 0.0
    %126 = vmatmul.mubr.f32.gmra.mxu0 %v59
    %v127 = vpop.f32.mrf.mxu0
    %v128 = vadd.f32 %v57, %v127
    %v129 = vpop.f32.mrf.mxu0
    %130 = vdwg.mxu0
    %v131 = vtanh.pop %v128
    %v132 = vld [vmem:[%s2] sm:$0xff]
    %v133 = vld [vmem:[%s2 + $0x8] sm:$0xff]
    %v134 = vld [vmem:[%s2 + $0x10] sm:$0xff]
    %v135 = vld [vmem:[%s2 + $0x18] sm:$0xff]
    %v136 = vld [vmem:[%s4 + $0x1] sm:$0x1]
    %v137 = vlaneseq
    %v138 = vshrl.u32 %v137, 7
    %v139 = vsub.s32 0, %v138
    %v140 = vrot.slane %v136, %v139
    %vm141 = vcmask 261120
    %v143 = vsel %vm141, %v131, 0
    %145 = vmatprep.subr.mxu0 0.0
    %146 = vmatpush1.msra.mxu0 0.0
    %147 = vmatprep.subr.mxu0 0.0
    %148 = vmatpush1.msra.mxu0 0.0
    %149 = vmatprep.subr.mxu0 0.0
    %150 = vmatpush1.msra.mxu0 0.0
    %151 = vmatprep.subr.mxu0 0.0
    %152 = vmatpush1.msra.mxu0 0.0
    %153 = vmatprep.subr.mxu0 0.0
    %154 = vmatpush1.msra.mxu0 0.0
    %155 = vmatprep.subr.mxu0 0.0
    %156 = vmatpush1.msra.mxu0 0.0
    %157 = vmatprep.subr.mxu0 0.0
    %158 = vmatpush1.msra.mxu0 0.0
    %159 = vmatprep.subr.mxu0 0.0
    %160 = vmatpush1.msra.mxu0 0.0
    %161 = vmatprep.subr.mxu0 0.0
    %162 = vmatpush1.msra.mxu0 0.0
    %163 = vmatprep.subr.mxu0 0.0
    %164 = vmatpush1.msra.mxu0 0.0
    %165 = vmatprep.subr.mxu0 0.0
    %166 = vmatpush1.msra.mxu0 0.0
    %167 = vmatprep.subr.mxu0 0.0
    %168 = vmatpush1.msra.mxu0 0.0
    %169 = vmatprep.subr.mxu0 0.0
    %170 = vmatpush1.msra.mxu0 %v135
    %171 = vmatprep.subr.mxu0 0.0
    %172 = vmatpush1.msra.mxu0 %v134
    %173 = vmatprep.subr.mxu0 0.0
    %174 = vmatpush1.msra.mxu0 %v133
    %175 = vmatprep.subr.mxu0 0.0
    %176 = vmatpush1.msra.mxu0 %v132
    %177 = vmatprep.subr.mxu0 0.0
    %178 = vmatpush2.msra.mxu0 0.0
    %179 = vmatprep.subr.mxu0 0.0
    %180 = vmatpush2.msra.mxu0 0.0
    %181 = vmatprep.subr.mxu0 0.0
    %182 = vmatpush2.msra.mxu0 0.0
    %183 = vmatprep.subr.mxu0 0.0
    %184 = vmatpush2.msra.mxu0 0.0
    %185 = vmatprep.subr.mxu0 0.0
    %186 = vmatpush2.msra.mxu0 0.0
    %187 = vmatprep.subr.mxu0 0.0
    %188 = vmatpush2.msra.mxu0 0.0
    %189 = vmatprep.subr.mxu0 0.0
    %190 = vmatpush2.msra.mxu0 0.0
    %191 = vmatprep.subr.mxu0 0.0
    %192 = vmatpush2.msra.mxu0 0.0
    %193 = vmatprep.subr.mxu0 0.0
    %194 = vmatpush2.msra.mxu0 0.0
    %195 = vmatprep.subr.mxu0 0.0
    %196 = vmatpush2.msra.mxu0 0.0
    %197 = vmatprep.subr.mxu0 0.0
    %198 = vmatpush2.msra.mxu0 0.0
    %199 = vmatprep.subr.mxu0 0.0
    %200 = vmatpush2.msra.mxu0 0.0
    %201 = vmatprep.subr.mxu0 0.0
    %202 = vmatpush2.msra.mxu0 0.0
    %203 = vmatprep.subr.mxu0 0.0
    %204 = vmatpush2.msra.mxu0 0.0
    %205 = vmatprep.subr.mxu0 0.0
    %206 = vmatpush2.msra.mxu0 0.0
    %207 = vmatprep.subr.mxu0 0.0
    %208 = vmatpush2.msra.mxu0 0.0
    %209 = vmatprep.mubr.f32.mxu0 0.0
    %210 = vmatmul.mubr.f32.gmra.mxu0 %v143
    %v211 = vpop.f32.mrf.mxu0
    %v212 = vadd.f32 %v140, %v211
    %v213 = vpop.f32.mrf.mxu0
    %214 = vdwg.mxu0
    %v215 = vtanh.pop %v212
    %v216 = vld [vmem:[%s3] sm:$0xff]
    %v217 = vld [vmem:[%s3 + $0x8] sm:$0xff]
    %v218 = vld [vmem:[%s3 + $0x10] sm:$0xff]
    %v219 = vld [vmem:[%s3 + $0x18] sm:$0xff]
    %v220 = vld [vmem:[%s4 + $0x2] sm:$0x1]
    %v221 = vlaneseq
    %v222 = vshrl.u32 %v221, 7
    %v223 = vsub.s32 0, %v222
    %v224 = vrot.slane %v220, %v223
    %v226 = vsel %vm141, %v215, 0
    %228 = vmatprep.subr.mxu0 0.0
    %229 = vmatpush1.msra.mxu0 0.0
    %230 = vmatprep.subr.mxu0 0.0
    %231 = vmatpush1.msra.mxu0 0.0
    %232 = vmatprep.subr.mxu0 0.0
    %233 = vmatpush1.msra.mxu0 0.0
    %234 = vmatprep.subr.mxu0 0.0
    %235 = vmatpush1.msra.mxu0 0.0
    %236 = vmatprep.subr.mxu0 0.0
    %237 = vmatpush1.msra.mxu0 0.0
    %238 = vmatprep.subr.mxu0 0.0
    %239 = vmatpush1.msra.mxu0 0.0
    %240 = vmatprep.subr.mxu0 0.0
    %241 = vmatpush1.msra.mxu0 0.0
    %242 = vmatprep.subr.mxu0 0.0
    %243 = vmatpush1.msra.mxu0 0.0
    %244 = vmatprep.subr.mxu0 0.0
    %245 = vmatpush1.msra.mxu0 0.0
    %246 = vmatprep.subr.mxu0 0.0
    %247 = vmatpush1.msra.mxu0 0.0
    %248 = vmatprep.subr.mxu0 0.0
    %249 = vmatpush1.msra.mxu0 0.0
    %250 = vmatprep.subr.mxu0 0.0
    %251 = vmatpush1.msra.mxu0 0.0
    %252 = vmatprep.subr.mxu0 0.0
    %253 = vmatpush1.msra.mxu0 %v219
    %254 = vmatprep.subr.mxu0 0.0
    %255 = vmatpush1.msra.mxu0 %v218
    %256 = vmatprep.subr.mxu0 0.0
    %257 = vmatpush1.msra.mxu0 %v217
    %258 = vmatprep.subr.mxu0 0.0
    %259 = vmatpush1.msra.mxu0 %v216
    %260 = vmatprep.subr.mxu0 0.0
    %261 = vmatpush2.msra.mxu0 0.0
    %262 = vmatprep.subr.mxu0 0.0
    %263 = vmatpush2.msra.mxu0 0.0
    %264 = vmatprep.subr.mxu0 0.0
    %265 = vmatpush2.msra.mxu0 0.0
    %266 = vmatprep.subr.mxu0 0.0
    %267 = vmatpush2.msra.mxu0 0.0
    %268 = vmatprep.subr.mxu0 0.0
    %269 = vmatpush2.msra.mxu0 0.0
    %270 = vmatprep.subr.mxu0 0.0
    %271 = vmatpush2.msra.mxu0 0.0
    %272 = vmatprep.subr.mxu0 0.0
    %273 = vmatpush2.msra.mxu0 0.0
    %274 = vmatprep.subr.mxu0 0.0
    %275 = vmatpush2.msra.mxu0 0.0
    %276 = vmatprep.subr.mxu0 0.0
    %277 = vmatpush2.msra.mxu0 0.0
    %278 = vmatprep.subr.mxu0 0.0
    %279 = vmatpush2.msra.mxu0 0.0
    %280 = vmatprep.subr.mxu0 0.0
    %281 = vmatpush2.msra.mxu0 0.0
    %282 = vmatprep.subr.mxu0 0.0
    %283 = vmatpush2.msra.mxu0 0.0
    %284 = vmatprep.subr.mxu0 0.0
    %285 = vmatpush2.msra.mxu0 0.0
    %286 = vmatprep.subr.mxu0 0.0
    %287 = vmatpush2.msra.mxu0 0.0
    %288 = vmatprep.subr.mxu0 0.0
    %289 = vmatpush2.msra.mxu0 0.0
    %290 = vmatprep.subr.mxu0 0.0
    %291 = vmatpush2.msra.mxu0 0.0
    %292 = vmatprep.mubr.f32.mxu0 0.0
    %293 = vmatmul.mubr.f32.gmra.mxu0 %v226
    %v294 = vpop.f32.mrf.mxu0
    %v295 = vadd.f32 %v224, %v294
    %v296 = vpop.f32.mrf.mxu0
    %297 = vdwg.mxu0
    %298 = vst [vmem:[#allocation2] sm:$0xff] %v295
    // Predicated region
    $region22: #{tpu_custom_call.1} parent=1 // pred_check
      _
    $region23: #{tpu_custom_call.1} parent=1 // pred_check_branch
      %300 = sbr.rel (0) target = $region25
    $region24: #{tpu_custom_call.1} parent=1 // pred_region
      %s302 = ssub.s32 128, 128
      %303 = vsyncadd [#allocation3], %s302
      %s305 = sshll.u32 [#allocation2], 4
      %s306 = int_to_ptr.vmem [resolvable:$true] %s305
      %308 = dma.vmem_to_hbm [thread:$0]  %s306, 128, %s5, [#allocation3]
    $region25: #{tpu_custom_call.1} parent=1 // pred_fallthru
      _
    // Predicated region
    $region26: #{tpu_custom_call.1} parent=1 // pred_check
      _
    $region27: #{tpu_custom_call.1} parent=1 // pred_check_branch
      %310 = sbr.rel (0) target = $region29
    $region28: #{tpu_custom_call.1} parent=1 // pred_region
      %311 = dma.done [#allocation3], 128
    $region29: #{tpu_custom_call.1} parent=1 // pred_fallthru
      _
    %312 = vsyncpa [#allocation3], 1

</llo_original>
